<compile_context>
chip_gen: v6e
topology: v6e:2x2x1
jax: 0.10.0
libtpu: 0.0.40
codegen_flags: <defaults>
</compile_context>

<pallas_src>
import functools

import jax
import jax.numpy as jnp
from jax.experimental import pallas as pl
from jax.experimental.pallas import tpu as pltpu


def _round_up(v: int, m: int) -> int:
    return (v + m - 1) // m * m


def _tpu_vmem_bytes() -> int:
    """Per-core VMEM capacity; conservative (v7x-sized) fallback if unqueryable."""
    try:
        v = int(pltpu.get_tpu_info().vmem_capacity_bytes)
        return v if v > 0 else (64 << 20)
    except Exception:
        return 64 << 20


def _pick_block_batch(B: int, per_item_bytes: int, budget_bytes: int,
                      min_steps: int) -> int:
    """Largest divisor of B whose block fits the budget, preferring >= min_steps
    grid steps (relaxing to >= 2, then >= 1 if B is too small)."""
    max_bb = max(1, budget_bytes // max(per_item_bytes, 1))
    for want in (min_steps, 2, 1):
        cands = [d for d in range(1, B + 1)
                 if B % d == 0 and d <= max_bb and B // d >= want]
        if cands:
            return max(cands)
    return 1


def _spatial_attn_kernel(w_ref, mask_ref, x_ref, o_ref, pad_ref, *,
                         k: int, W: int, OFF: int):
    """One grid step handles BB batch items.

    w_ref    : SMEM (2*k*k,) f32 conv weights, ordering [ci, dy, dx]
               (avg channel already pre-scaled by 1/C in the wrapper)
    mask_ref : VMEM (k, 1, H*W) f32 per-dx column-validity masks (0/1)
    x_ref    : VMEM (BB, C, H*W) input block (native dtype), lane-dense
    o_ref    : VMEM (BB, C, H*W) output block
    pad_ref  : VMEM (2, BB, L) f32 flat pooled maps with zero halo on both ends
    """
    BB, C, HW = x_ref.shape
    L = pad_ref.shape[-1]
    p = (k - 1) // 2
    base = OFF - (p * W + p)          # slice start for tap (dy=0, dx=0)

    # Zero only the halo regions; [OFF, OFF+HW) is fully rewritten below for every
    # item.  Done every step (scratch is per-core / uninitialized; cheap).
    pad_ref[:, :, :OFF] = jnp.zeros((2, BB, OFF), jnp.float32)
    pad_ref[:, :, OFF + HW:L] = jnp.zeros((2, BB, L - OFF - HW), jnp.float32)

    # ---- channel pooling: one read of x per item, both reductions fused --------
    # (The conv is hoisted out of this loop, so the unrolled body is tiny; static
    #  indices keep the sublane-row stores simple.)
    for b in range(BB):
        xb = x_ref[b]                                                # (C, HW)
        # channel 0 = max, channel 1 = sum (1/C folded into the avg weights)
        pad_ref[0, b:b + 1, OFF:OFF + HW] = (
            jnp.max(xb, axis=0, keepdims=True).astype(jnp.float32))
        pad_ref[1, b:b + 1, OFF:OFF + HW] = (
            jnp.sum(xb, axis=0, keepdims=True, dtype=jnp.float32))

    # ---- k x k 'same' conv, 2 -> 1 channels, no bias, sublane-batched over BB ---
    # Each tap is a constant-offset lane slice of the flat padded maps: vertical
    # out-of-range taps land in the zero halo; horizontal wrap across rows is
    # removed by the per-dx column mask (shared by all ci, dy of that dx).
    acc = jnp.zeros((BB, HW), jnp.float32)
    for dx in range(k):
        part = jnp.zeros((BB, HW), jnp.float32)
        for ci in range(2):
            for dy in range(k):
                wv = w_ref[ci * k * k + dy * k + dx]     # scalar: 2*k*k splats/step
                start = base + dy * W + dx
                part = part + wv * pad_ref[ci, :, start:start + HW]
        if dx != p:                                      # center column: all valid
            part = part * mask_ref[dx]                   # (1,HW) bcast over BB rows
        acc = acc + part

    v = jax.nn.sigmoid(acc)                              # (BB, HW) f32 (EUP)

    # ---- out = x * v, v broadcast over channels; multiply in f32, cast once ----
    o_ref[...] = (x_ref[...] * v[:, None, :]).astype(o_ref.dtype)


def spatial_attention(x: jax.Array, conv_weight: jax.Array,
                      *, block_bytes_budget: int | None = None) -> jax.Array:
    """x: (B, C, H, W); conv_weight: (1, 2, k, k) (OIHW, as in nn.Conv2d, no bias)."""
    B, C, H, W = x.shape
    assert tuple(conv_weight.shape[:2]) == (1, 2)
    k = int(conv_weight.shape[2])
    assert k in (3, 5, 7) and int(conv_weight.shape[3]) == k
    p = (k - 1) // 2
    HW = H * W

    # Lane-dense flat view of NCHW (free: contiguous reshape).
    x_flat = x.reshape(B, C, HW)

    # Flat conv weights for SMEM, ordering [ci, dy, dx]; fold the 1/C of the
    # channel-mean into the avg-channel (ci = 1) weights.
    w = conv_weight.reshape(2, k, k).astype(jnp.float32)
    w = w * jnp.array([1.0, 1.0 / C], jnp.float32)[:, None, None]
    w_flat = w.reshape(-1)

    # Per-dx column-validity masks: tap column (w + dx - p) must stay inside [0, W).
    w_idx = jnp.arange(HW, dtype=jnp.int32) % W                       # (HW,)
    dxs = jnp.arange(k, dtype=jnp.int32)[:, None]                     # (k, 1)
    col = w_idx[None, :] + dxs - p
    col_masks = ((col >= 0) & (col < W)).astype(jnp.float32).reshape(k, 1, HW)

    # Flat padded-scratch geometry: pooled data starts at 128-aligned OFF with at
    # least p*W + p zeros on each side (the vertical halo in flat space).
    OFF = _round_up(p * W + p, 128)
    L = _round_up(OFF + HW + p * W + p, 128)

    # ---- generation-aware sizing -----------------------------------------------
    vmem_cap = _tpu_vmem_bytes()
    two_cores = vmem_cap <= (64 << 20)          # v7x: 64 MiB VMEM, 2 TCs per chip
    if block_bytes_budget is None:
        block_bytes_budget = min(32 << 20, vmem_cap // 4)
    min_steps = 4 if two_cores else 2           # >= 2 pipelined steps per core

    io_item = C * HW * x.dtype.itemsize * 2     # in + out, per item (single buffer)
    pad_item = 2 * L * 4                        # pooled-scratch rows per item
    BB = _pick_block_batch(B, io_item + pad_item, block_bytes_budget, min_steps)
    grid = (B // BB,)

    mask_bytes = k * HW * 4
    cap = max(32 << 20, vmem_cap - (8 << 20))   # leave compiler headroom (56 MiB v7x)
    vmem_limit = int(2 * BB * io_item + BB * pad_item + 2 * mask_bytes + (8 << 20))
    vmem_limit = max(32 << 20, min(vmem_limit, cap))

    kernel = functools.partial(_spatial_attn_kernel, k=k, W=W, OFF=OFF)

    out_flat = pl.pallas_call(
        kernel,
        out_shape=jax.ShapeDtypeStruct((B, C, HW), x.dtype),
        grid=grid,
        in_specs=[
            pl.BlockSpec(memory_space=pltpu.MemorySpace.SMEM),        # conv weights
            pl.BlockSpec((k, 1, HW), lambda b: (0, 0, 0)),            # column masks
            pl.BlockSpec((BB, C, HW), lambda b: (b, 0, 0)),           # x block
        ],
        out_specs=pl.BlockSpec((BB, C, HW), lambda b: (b, 0, 0)),
        scratch_shapes=[pltpu.VMEM((2, BB, L), jnp.float32)],
        compiler_params=pltpu.CompilerParams(
            dimension_semantics=("parallel",),
            vmem_limit_bytes=vmem_limit,
        ),
    )(w_flat, col_masks, x_flat)

    return out_flat.reshape(B, C, H, W)


def _reference(x, conv_weight):
    """Pure-JAX reference matching the PyTorch forward."""
    k = conv_weight.shape[2]
    pad = (k - 1) // 2
    avg_x = jnp.mean(x, axis=1, keepdims=True)
    max_x = jnp.max(x, axis=1, keepdims=True)
    cat = jnp.concatenate([max_x, avg_x], axis=1)
    v = jax.lax.conv_general_dilated(
        cat.astype(jnp.float32), conv_weight.astype(jnp.float32),
        window_strides=(1, 1), padding=[(pad, pad), (pad, pad)],
        dimension_numbers=("NCHW", "OIHW", "NCHW"))
    return x * jax.nn.sigmoid(v)


if __name__ == "__main__":
    key = jax.random.PRNGKey(0)
    kx, kw = jax.random.split(key)

    B, C, H, W = 2, 4, 16, 16
    k = 3

    x = jax.random.normal(kx, (B, C, H, W), dtype=jnp.float32)
    fan_in = 2 * k * k
    conv_weight = jax.random.uniform(
        kw, (1, 2, k, k), dtype=jnp.float32,
        minval=-1.0 / (fan_in ** 0.5), maxval=1.0 / (fan_in ** 0.5))

    out = spatial_attention(x, conv_weight)
    out = jax.block_until_ready(out)

    ref = _reference(x, conv_weight)
    assert out.shape == (B, C, H, W)
    assert jnp.allclose(out, ref, atol=1e-5, rtol=1e-5), "mismatch vs reference"

    print("KERNEL_OK")
</pallas_src>

<mosaic_0001>
module attributes {stable_mosaic.version = 11 : i64} {
  func.func @_spatial_attn_kernel(%arg0: i32, %arg1: memref<18xf32, #tpu.memory_space<smem>>, %arg2: memref<3x1x256xf32, #tpu.memory_space<vmem>>, %arg3: memref<1x4x256xf32, #tpu.memory_space<vmem>>, %arg4: memref<1x4x256xf32, #tpu.memory_space<vmem>>, %arg5: memref<2x1x512xf32, #tpu.memory_space<vmem>>) attributes {dimension_semantics = [#tpu.dimension_semantics<parallel>], iteration_bounds = array<i64: 2>, scalar_prefetch = 0 : i64, scratch_operands = 1 : i64, tpu.core_type = #tpu.core_type<tc>, window_params = [{transform_indices = @transform_0, window_bounds = array<i64: 18>}, {pipeline_mode = #tpu.pipeline_mode<synchronous>, transform_indices = @transform_1, window_bounds = array<i64: 3, 1, 256>}, {transform_indices = @transform_2, window_bounds = array<i64: 1, 4, 256>}, {transform_indices = @transform_3, window_bounds = array<i64: 1, 4, 256>}]} {
    %cst = arith.constant 0.000000e+00 : f32
    %0 = vector.broadcast %cst : f32 to vector<2x1x128xf32>
    %c0 = arith.constant 0 : index
    %c0_0 = arith.constant 0 : index
    %c0_1 = arith.constant 0 : index
    %1 = vector.load %arg5[%c0, %c0_0, %c0_1] : memref<2x1x512xf32, #tpu.memory_space<vmem>>, vector<2x1x128xf32>
    tpu.vector_store %arg5[%c0, %c0_0, %c0_1], %0 {strides = array<i32>} : memref<2x1x512xf32, #tpu.memory_space<vmem>>, vector<2x1x128xf32>,
    %cst_2 = arith.constant 0.000000e+00 : f32
    %2 = vector.broadcast %cst_2 : f32 to vector<2x1x128xf32>
    %c0_3 = arith.constant 0 : index
    %c0_4 = arith.constant 0 : index
    %c384 = arith.constant 384 : index
    %3 = vector.load %arg5[%c0_3, %c0_4, %c384] : memref<2x1x512xf32, #tpu.memory_space<vmem>>, vector<2x1x128xf32>
    tpu.vector_store %arg5[%c0_3, %c0_4, %c384], %2 {strides = array<i32>} : memref<2x1x512xf32, #tpu.memory_space<vmem>>, vector<2x1x128xf32>,
    %c0_5 = arith.constant 0 : index
    %c0_6 = arith.constant 0 : index
    %c0_7 = arith.constant 0 : index
    %4 = vector.load %arg3[%c0_5, %c0_6, %c0_7] : memref<1x4x256xf32, #tpu.memory_space<vmem>>, vector<1x4x256xf32>
    %5 = vector.shape_cast %4 : vector<1x4x256xf32> to vector<4x256xf32>
    %cst_8 = arith.constant dense<0xFF800000> : vector<256xf32>
    %6 = vector.multi_reduction <maximumf>, %5, %cst_8 [0] : vector<4x256xf32> to vector<256xf32>
    %7 = vector.shape_cast %6 : vector<256xf32> to vector<1x256xf32>
    %c0_9 = arith.constant 0 : index
    %c0_10 = arith.constant 0 : index
    %c128 = arith.constant 128 : index
    %8 = vector.load %arg5[%c0_9, %c0_10, %c128] : memref<2x1x512xf32, #tpu.memory_space<vmem>>, vector<1x1x256xf32>
    %9 = vector.shape_cast %8 : vector<1x1x256xf32> to vector<1x256xf32>
    %10 = vector.shape_cast %7 : vector<1x256xf32> to vector<1x1x256xf32>
    tpu.vector_store %arg5[%c0_9, %c0_10, %c128], %10 {strides = array<i32>} : memref<2x1x512xf32, #tpu.memory_space<vmem>>, vector<1x1x256xf32>,
    %cst_11 = arith.constant dense<0.000000e+00> : vector<256xf32>
    %11 = vector.multi_reduction <add>, %5, %cst_11 [0] : vector<4x256xf32> to vector<256xf32>
    %12 = vector.shape_cast %11 : vector<256xf32> to vector<1x256xf32>
    %c1 = arith.constant 1 : index
    %c0_12 = arith.constant 0 : index
    %c128_13 = arith.constant 128 : index
    %13 = vector.load %arg5[%c1, %c0_12, %c128_13] : memref<2x1x512xf32, #tpu.memory_space<vmem>>, vector<1x1x256xf32>
    %14 = vector.shape_cast %13 : vector<1x1x256xf32> to vector<1x256xf32>
    %15 = vector.shape_cast %12 : vector<1x256xf32> to vector<1x1x256xf32>
    tpu.vector_store %arg5[%c1, %c0_12, %c128_13], %15 {strides = array<i32>} : memref<2x1x512xf32, #tpu.memory_space<vmem>>, vector<1x1x256xf32>,
    %cst_14 = arith.constant 0.000000e+00 : f32
    %16 = vector.broadcast %cst_14 : f32 to vector<1x256xf32>
    %cst_15 = arith.constant 0.000000e+00 : f32
    %17 = vector.broadcast %cst_15 : f32 to vector<1x256xf32>
    %c0_16 = arith.constant 0 : index
    %18 = memref.load %arg1[%c0_16] : memref<18xf32, #tpu.memory_space<smem>>
    %c0_17 = arith.constant 0 : index
    %c0_18 = arith.constant 0 : index
    %c111 = arith.constant 111 : index
    %19 = vector.load %arg5[%c0_17, %c0_18, %c111] : memref<2x1x512xf32, #tpu.memory_space<vmem>>, vector<1x1x256xf32>
    %20 = vector.shape_cast %19 : vector<1x1x256xf32> to vector<1x256xf32>
    %21 = vector.broadcast %18 : f32 to vector<1x256xf32>
    %22 = arith.mulf %21, %20 : vector<1x256xf32>
    %23 = arith.addf %17, %22 : vector<1x256xf32>
    %c3 = arith.constant 3 : index
    %24 = memref.load %arg1[%c3] : memref<18xf32, #tpu.memory_space<smem>>
    %c0_19 = arith.constant 0 : index
    %c0_20 = arith.constant 0 : index
    %c127 = arith.constant 127 : index
    %25 = vector.load %arg5[%c0_19, %c0_20, %c127] : memref<2x1x512xf32, #tpu.memory_space<vmem>>, vector<1x1x256xf32>
    %26 = vector.shape_cast %25 : vector<1x1x256xf32> to vector<1x256xf32>
    %27 = vector.broadcast %24 : f32 to vector<1x256xf32>
    %28 = arith.mulf %27, %26 : vector<1x256xf32>
    %29 = arith.addf %23, %28 : vector<1x256xf32>
    %c6 = arith.constant 6 : index
    %30 = memref.load %arg1[%c6] : memref<18xf32, #tpu.memory_space<smem>>
    %c0_21 = arith.constant 0 : index
    %c0_22 = arith.constant 0 : index
    %c143 = arith.constant 143 : index
    %31 = vector.load %arg5[%c0_21, %c0_22, %c143] : memref<2x1x512xf32, #tpu.memory_space<vmem>>, vector<1x1x256xf32>
    %32 = vector.shape_cast %31 : vector<1x1x256xf32> to vector<1x256xf32>
    %33 = vector.broadcast %30 : f32 to vector<1x256xf32>
    %34 = arith.mulf %33, %32 : vector<1x256xf32>
    %35 = arith.addf %29, %34 : vector<1x256xf32>
    %c9 = arith.constant 9 : index
    %36 = memref.load %arg1[%c9] : memref<18xf32, #tpu.memory_space<smem>>
    %c1_23 = arith.constant 1 : index
    %c0_24 = arith.constant 0 : index
    %c111_25 = arith.constant 111 : index
    %37 = vector.load %arg5[%c1_23, %c0_24, %c111_25] : memref<2x1x512xf32, #tpu.memory_space<vmem>>, vector<1x1x256xf32>
    %38 = vector.shape_cast %37 : vector<1x1x256xf32> to vector<1x256xf32>
    %39 = vector.broadcast %36 : f32 to vector<1x256xf32>
    %40 = arith.mulf %39, %38 : vector<1x256xf32>
    %41 = arith.addf %35, %40 : vector<1x256xf32>
    %c12 = arith.constant 12 : index
    %42 = memref.load %arg1[%c12] : memref<18xf32, #tpu.memory_space<smem>>
    %c1_26 = arith.constant 1 : index
    %c0_27 = arith.constant 0 : index
    %c127_28 = arith.constant 127 : index
    %43 = vector.load %arg5[%c1_26, %c0_27, %c127_28] : memref<2x1x512xf32, #tpu.memory_space<vmem>>, vector<1x1x256xf32>
    %44 = vector.shape_cast %43 : vector<1x1x256xf32> to vector<1x256xf32>
    %45 = vector.broadcast %42 : f32 to vector<1x256xf32>
    %46 = arith.mulf %45, %44 : vector<1x256xf32>
    %47 = arith.addf %41, %46 : vector<1x256xf32>
    %c15 = arith.constant 15 : index
    %48 = memref.load %arg1[%c15] : memref<18xf32, #tpu.memory_space<smem>>
    %c1_29 = arith.constant 1 : index
    %c0_30 = arith.constant 0 : index
    %c143_31 = arith.constant 143 : index
    %49 = vector.load %arg5[%c1_29, %c0_30, %c143_31] : memref<2x1x512xf32, #tpu.memory_space<vmem>>, vector<1x1x256xf32>
    %50 = vector.shape_cast %49 : vector<1x1x256xf32> to vector<1x256xf32>
    %51 = vector.broadcast %48 : f32 to vector<1x256xf32>
    %52 = arith.mulf %51, %50 : vector<1x256xf32>
    %53 = arith.addf %47, %52 : vector<1x256xf32>
    %c0_32 = arith.constant 0 : index
    %c0_33 = arith.constant 0 : index
    %c0_34 = arith.constant 0 : index
    %54 = vector.load %arg2[%c0_32, %c0_33, %c0_34] : memref<3x1x256xf32, #tpu.memory_space<vmem>>, vector<1x1x256xf32>
    %55 = vector.shape_cast %54 : vector<1x1x256xf32> to vector<1x256xf32>
    %56 = arith.mulf %53, %55 : vector<1x256xf32>
    %57 = arith.addf %16, %56 : vector<1x256xf32>
    %cst_35 = arith.constant 0.000000e+00 : f32
    %58 = vector.broadcast %cst_35 : f32 to vector<1x256xf32>
    %c1_36 = arith.constant 1 : index
    %59 = memref.load %arg1[%c1_36] : memref<18xf32, #tpu.memory_space<smem>>
    %c0_37 = arith.constant 0 : index
    %c0_38 = arith.constant 0 : index
    %c112 = arith.constant 112 : index
    %60 = vector.load %arg5[%c0_37, %c0_38, %c112] : memref<2x1x512xf32, #tpu.memory_space<vmem>>, vector<1x1x256xf32>
    %61 = vector.shape_cast %60 : vector<1x1x256xf32> to vector<1x256xf32>
    %62 = vector.broadcast %59 : f32 to vector<1x256xf32>
    %63 = arith.mulf %62, %61 : vector<1x256xf32>
    %64 = arith.addf %58, %63 : vector<1x256xf32>
    %c4 = arith.constant 4 : index
    %65 = memref.load %arg1[%c4] : memref<18xf32, #tpu.memory_space<smem>>
    %c0_39 = arith.constant 0 : index
    %c0_40 = arith.constant 0 : index
    %c128_41 = arith.constant 128 : index
    %66 = vector.load %arg5[%c0_39, %c0_40, %c128_41] : memref<2x1x512xf32, #tpu.memory_space<vmem>>, vector<1x1x256xf32>
    %67 = vector.shape_cast %66 : vector<1x1x256xf32> to vector<1x256xf32>
    %68 = vector.broadcast %65 : f32 to vector<1x256xf32>
    %69 = arith.mulf %68, %67 : vector<1x256xf32>
    %70 = arith.addf %64, %69 : vector<1x256xf32>
    %c7 = arith.constant 7 : index
    %71 = memref.load %arg1[%c7] : memref<18xf32, #tpu.memory_space<smem>>
    %c0_42 = arith.constant 0 : index
    %c0_43 = arith.constant 0 : index
    %c144 = arith.constant 144 : index
    %72 = vector.load %arg5[%c0_42, %c0_43, %c144] : memref<2x1x512xf32, #tpu.memory_space<vmem>>, vector<1x1x256xf32>
    %73 = vector.shape_cast %72 : vector<1x1x256xf32> to vector<1x256xf32>
    %74 = vector.broadcast %71 : f32 to vector<1x256xf32>
    %75 = arith.mulf %74, %73 : vector<1x256xf32>
    %76 = arith.addf %70, %75 : vector<1x256xf32>
    %c10 = arith.constant 10 : index
    %77 = memref.load %arg1[%c10] : memref<18xf32, #tpu.memory_space<smem>>
    %c1_44 = arith.constant 1 : index
    %c0_45 = arith.constant 0 : index
    %c112_46 = arith.constant 112 : index
    %78 = vector.load %arg5[%c1_44, %c0_45, %c112_46] : memref<2x1x512xf32, #tpu.memory_space<vmem>>, vector<1x1x256xf32>
    %79 = vector.shape_cast %78 : vector<1x1x256xf32> to vector<1x256xf32>
    %80 = vector.broadcast %77 : f32 to vector<1x256xf32>
    %81 = arith.mulf %80, %79 : vector<1x256xf32>
    %82 = arith.addf %76, %81 : vector<1x256xf32>
    %c13 = arith.constant 13 : index
    %83 = memref.load %arg1[%c13] : memref<18xf32, #tpu.memory_space<smem>>
    %c1_47 = arith.constant 1 : index
    %c0_48 = arith.constant 0 : index
    %c128_49 = arith.constant 128 : index
    %84 = vector.load %arg5[%c1_47, %c0_48, %c128_49] : memref<2x1x512xf32, #tpu.memory_space<vmem>>, vector<1x1x256xf32>
    %85 = vector.shape_cast %84 : vector<1x1x256xf32> to vector<1x256xf32>
    %86 = vector.broadcast %83 : f32 to vector<1x256xf32>
    %87 = arith.mulf %86, %85 : vector<1x256xf32>
    %88 = arith.addf %82, %87 : vector<1x256xf32>
    %c16 = arith.constant 16 : index
    %89 = memref.load %arg1[%c16] : memref<18xf32, #tpu.memory_space<smem>>
    %c1_50 = arith.constant 1 : index
    %c0_51 = arith.constant 0 : index
    %c144_52 = arith.constant 144 : index
    %90 = vector.load %arg5[%c1_50, %c0_51, %c144_52] : memref<2x1x512xf32, #tpu.memory_space<vmem>>, vector<1x1x256xf32>
    %91 = vector.shape_cast %90 : vector<1x1x256xf32> to vector<1x256xf32>
    %92 = vector.broadcast %89 : f32 to vector<1x256xf32>
    %93 = arith.mulf %92, %91 : vector<1x256xf32>
    %94 = arith.addf %88, %93 : vector<1x256xf32>
    %95 = arith.addf %57, %94 : vector<1x256xf32>
    %cst_53 = arith.constant 0.000000e+00 : f32
    %96 = vector.broadcast %cst_53 : f32 to vector<1x256xf32>
    %c2 = arith.constant 2 : index
    %97 = memref.load %arg1[%c2] : memref<18xf32, #tpu.memory_space<smem>>
    %c0_54 = arith.constant 0 : index
    %c0_55 = arith.constant 0 : index
    %c113 = arith.constant 113 : index
    %98 = vector.load %arg5[%c0_54, %c0_55, %c113] : memref<2x1x512xf32, #tpu.memory_space<vmem>>, vector<1x1x256xf32>
    %99 = vector.shape_cast %98 : vector<1x1x256xf32> to vector<1x256xf32>
    %100 = vector.broadcast %97 : f32 to vector<1x256xf32>
    %101 = arith.mulf %100, %99 : vector<1x256xf32>
    %102 = arith.addf %96, %101 : vector<1x256xf32>
    %c5 = arith.constant 5 : index
    %103 = memref.load %arg1[%c5] : memref<18xf32, #tpu.memory_space<smem>>
    %c0_56 = arith.constant 0 : index
    %c0_57 = arith.constant 0 : index
    %c129 = arith.constant 129 : index
    %104 = vector.load %arg5[%c0_56, %c0_57, %c129] : memref<2x1x512xf32, #tpu.memory_space<vmem>>, vector<1x1x256xf32>
    %105 = vector.shape_cast %104 : vector<1x1x256xf32> to vector<1x256xf32>
    %106 = vector.broadcast %103 : f32 to vector<1x256xf32>
    %107 = arith.mulf %106, %105 : vector<1x256xf32>
    %108 = arith.addf %102, %107 : vector<1x256xf32>
    %c8 = arith.constant 8 : index
    %109 = memref.load %arg1[%c8] : memref<18xf32, #tpu.memory_space<smem>>
    %c0_58 = arith.constant 0 : index
    %c0_59 = arith.constant 0 : index
    %c145 = arith.constant 145 : index
    %110 = vector.load %arg5[%c0_58, %c0_59, %c145] : memref<2x1x512xf32, #tpu.memory_space<vmem>>, vector<1x1x256xf32>
    %111 = vector.shape_cast %110 : vector<1x1x256xf32> to vector<1x256xf32>
    %112 = vector.broadcast %109 : f32 to vector<1x256xf32>
    %113 = arith.mulf %112, %111 : vector<1x256xf32>
    %114 = arith.addf %108, %113 : vector<1x256xf32>
    %c11 = arith.constant 11 : index
    %115 = memref.load %arg1[%c11] : memref<18xf32, #tpu.memory_space<smem>>
    %c1_60 = arith.constant 1 : index
    %c0_61 = arith.constant 0 : index
    %c113_62 = arith.constant 113 : index
    %116 = vector.load %arg5[%c1_60, %c0_61, %c113_62] : memref<2x1x512xf32, #tpu.memory_space<vmem>>, vector<1x1x256xf32>
    %117 = vector.shape_cast %116 : vector<1x1x256xf32> to vector<1x256xf32>
    %118 = vector.broadcast %115 : f32 to vector<1x256xf32>
    %119 = arith.mulf %118, %117 : vector<1x256xf32>
    %120 = arith.addf %114, %119 : vector<1x256xf32>
    %c14 = arith.constant 14 : index
    %121 = memref.load %arg1[%c14] : memref<18xf32, #tpu.memory_space<smem>>
    %c1_63 = arith.constant 1 : index
    %c0_64 = arith.constant 0 : index
    %c129_65 = arith.constant 129 : index
    %122 = vector.load %arg5[%c1_63, %c0_64, %c129_65] : memref<2x1x512xf32, #tpu.memory_space<vmem>>, vector<1x1x256xf32>
    %123 = vector.shape_cast %122 : vector<1x1x256xf32> to vector<1x256xf32>
    %124 = vector.broadcast %121 : f32 to vector<1x256xf32>
    %125 = arith.mulf %124, %123 : vector<1x256xf32>
    %126 = arith.addf %120, %125 : vector<1x256xf32>
    %c17 = arith.constant 17 : index
    %127 = memref.load %arg1[%c17] : memref<18xf32, #tpu.memory_space<smem>>
    %c1_66 = arith.constant 1 : index
    %c0_67 = arith.constant 0 : index
    %c145_68 = arith.constant 145 : index
    %128 = vector.load %arg5[%c1_66, %c0_67, %c145_68] : memref<2x1x512xf32, #tpu.memory_space<vmem>>, vector<1x1x256xf32>
    %129 = vector.shape_cast %128 : vector<1x1x256xf32> to vector<1x256xf32>
    %130 = vector.broadcast %127 : f32 to vector<1x256xf32>
    %131 = arith.mulf %130, %129 : vector<1x256xf32>
    %132 = arith.addf %126, %131 : vector<1x256xf32>
    %c2_69 = arith.constant 2 : index
    %c0_70 = arith.constant 0 : index
    %c0_71 = arith.constant 0 : index
    %133 = vector.load %arg2[%c2_69, %c0_70, %c0_71] : memref<3x1x256xf32, #tpu.memory_space<vmem>>, vector<1x1x256xf32>
    %134 = vector.shape_cast %133 : vector<1x1x256xf32> to vector<1x256xf32>
    %135 = arith.mulf %132, %134 : vector<1x256xf32>
    %136 = arith.addf %95, %135 : vector<1x256xf32>
    %137 = arith.negf %136 : vector<1x256xf32>
    %138 = math.exp %137 : vector<1x256xf32>
    %cst_72 = arith.constant 1.000000e+00 : f32
    %139 = vector.broadcast %cst_72 : f32 to vector<1x256xf32>
    %140 = arith.addf %139, %138 : vector<1x256xf32>
    %141 = arith.divf %139, %140 : vector<1x256xf32>
    %c0_73 = arith.constant 0 : index
    %c0_74 = arith.constant 0 : index
    %c0_75 = arith.constant 0 : index
    %142 = vector.load %arg3[%c0_73, %c0_74, %c0_75] : memref<1x4x256xf32, #tpu.memory_space<vmem>>, vector<1x4x256xf32>
    %143 = vector.shape_cast %141 : vector<1x256xf32> to vector<1x1x256xf32>
    %144 = vector.broadcast %143 : vector<1x1x256xf32> to vector<1x4x256xf32>
    %145 = arith.mulf %142, %144 : vector<1x4x256xf32>
    %c0_76 = arith.constant 0 : index
    %c0_77 = arith.constant 0 : index
    %c0_78 = arith.constant 0 : index
    %146 = vector.load %arg4[%c0_76, %c0_77, %c0_78] : memref<1x4x256xf32, #tpu.memory_space<vmem>>, vector<1x4x256xf32>
    tpu.vector_store %arg4[%c0_76, %c0_77, %c0_78], %145 {strides = array<i32>} : memref<1x4x256xf32, #tpu.memory_space<vmem>>, vector<1x4x256xf32>,
    return
  }
  func.func @transform_0(%arg0: i32) -> i32 {
    %c0_i32 = arith.constant 0 : i32
    %c0_i32_0 = arith.constant 0 : i32
    return %c0_i32 : i32
  }
  func.func @transform_1(%arg0: i32) -> (i32, i32, i32) {
    %c0_i32 = arith.constant 0 : i32
    %c0_i32_0 = arith.constant 0 : i32
    %c0_i32_1 = arith.constant 0 : i32
    %c0_i32_2 = arith.constant 0 : i32
    return %c0_i32, %c0_i32_0, %c0_i32_1 : i32, i32, i32
  }
  func.func @transform_2(%arg0: i32) -> (i32, i32, i32) {
    %c0_i32 = arith.constant 0 : i32
    %c0_i32_0 = arith.constant 0 : i32
    %c0_i32_1 = arith.constant 0 : i32
    return %arg0, %c0_i32, %c0_i32_0 : i32, i32, i32
  }
  func.func @transform_3(%arg0: i32) -> (i32, i32, i32) {
    %c0_i32 = arith.constant 0 : i32
    %c0_i32_0 = arith.constant 0 : i32
    %c0_i32_1 = arith.constant 0 : i32
    return %arg0, %c0_i32, %c0_i32_0 : i32, i32, i32
  }
}

</mosaic_0001>

<llo_original>
// kernel: tpu_custom_call.1
$region0: #{tpu_custom_call.1}
  #allocation0 [shape = 'u32[]', space=smem, size = 0x4, offset = 0x4, fixed_abs, tag = 'smem constant byte address 0x4 - core index']
  #allocation1 [shape = 'u32[144,128]{1,0:T(1,128)}', space=vmem, size = 0x12000, scoped, tag = 'internal scratch']
  #allocation2 [shape = 'f32[2,1,512]{2,1,0:T(1,128)}', space=vmem, size = 0x1000, scoped, tag = 'scratch operand']
  %s0 = inlined_call_operand.hbm [shape: f32[18], index: 0, kind: input, shape index: {}]
  %s1 = inlined_call_operand.hbm [shape: f32[3,1,256], index: 1, kind: input, shape index: {}]
  %s2 = inlined_call_operand.hbm [shape: f32[2,4,256], index: 2, kind: input, shape index: {}]
  %s3 = inlined_call_operand.hbm [shape: f32[2,4,256], index: 3, kind: output, shape index: {}]
  %s4 = sld [smem:[#allocation0]]
  $region57: #{tpu_custom_call.1} parent=0
    _
  %s6 = ssub.s32 1, %s4
  %s7 = scalar_select 0, %s6, %s4
  $region1: #{tpu_custom_call.1} parent=0
    #allocation3 [shape = 'u8[512]{0}', space=smem, size = 0x200, scoped, tag = 'input window, operand 0, single buffered']
    #allocation4 [shape = 's32[2]{0}', space=sflag, size = 0x8, scoped, tag = 'scoped memory for tpu_custom_call.1']
    #allocation5 [shape = 's32[2]{0}', space=sflag, size = 0x8, scoped, tag = 'scoped memory for tpu_custom_call.1']
    #allocation6 [shape = 's32[2]{0}', space=sflag, size = 0x8, scoped, tag = 'scoped memory for tpu_custom_call.1']
    #allocation7 [shape = 'u8[3072]{0}', space=vmem, size = 0xc00, scoped, tag = 'input window, operand 1, single buffered']
    #allocation8 [shape = 'u8[8192]{0}', space=vmem, size = 0x2000, scoped, tag = 'input window, operand 2']
    #allocation9 [shape = 's32[2]{0}', space=sflag, size = 0x8, scoped, tag = 'scoped memory for tpu_custom_call.1']
    #allocation10 [shape = 'u8[8192]{0}', space=vmem, size = 0x2000, scoped, tag = 'output window, operand 0']
    %8 = vsyncpa [#allocation6], 0
    %9 = vsyncpa [#allocation4], 0
    %10 = vsyncpa [#allocation9], 0
    %s11 = scalar_lea.sflag [#allocation9], 1
    %12 = vsyncpa %s11, 0
    %13 = vsyncpa [#allocation5], 0
    %s14 = scalar_lea.sflag [#allocation5], 1
    %15 = vsyncpa %s14, 0
    loop: start=0, step=1, limit=4
    $region2: #{tpu_custom_call.1} parent=1 // loop_pre_header
      _
    $region3: #{tpu_custom_call.1} parent=1 // loop_header
      %s17 = sphi 0, %s21
      %p18 = scmp.ge.s32.totalorder %s17, 4
      %s25 = sphi 0, %s25
      %s27 = sphi 0, %s25
      %s28 = sphi 0, %s27
      %s42 = sphi 0, %s28
      %s46 = sphi 0, %s46
      %s48 = sphi 0, %s46
      %s49 = sphi 0, %s48
      %s63 = sphi 0, %s49
      %s69 = sphi 0, %s71
      %s72 = sphi 0, %s69
      %s73 = sphi 0, %s72
      %s89 = sphi 0, %s73
      %s95 = sphi 0, %s97
      %s98 = sphi 0, %s95
      %s99 = sphi 0, %s98
      %s115 = sphi 0, %s99
    $region4: #{tpu_custom_call.1} parent=1 // loop_header_branch
      %20 = sbr.rel (%p18) target = $region8
    $region5: #{tpu_custom_call.1} parent=1 // loop_body
      %s22 = ssub.s32 %s17, 1
      %s23 = ssub.s32 %s17, 2
      %s24 = sadd.s32 %s17, 1
      %s26 = sadd.s32 %s25, 1
      %p29 = scmp.eq.s32.totalorder %s17, 1
      %p30 = scmp.ne.s32.totalorder %s25, %s27
      %p31 = scmp.eq.s32.totalorder %s17, 0
      %p32 = por %p30, %p31
      %p33 = scmp.ne.s32.totalorder %s25, %s27
      %p34 = scmp.eq.s32.totalorder %s22, 1
      %p35 = por %p33, %p34
      %p36 = scmp.ne.s32.totalorder %s27, %s28
      %p37 = scmp.eq.s32.totalorder %s22, 0
      %p38 = por %p36, %p37
      %p39 = scmp.ne.s32.totalorder %s27, %s28
      %p40 = scmp.eq.s32.totalorder %s23, 1
      %p41 = por %p39, %p40
      %p43 = scmp.ne.s32.totalorder %s28, %s42
      %p44 = scmp.eq.s32.totalorder %s23, 0
      %p45 = por %p43, %p44
      %s47 = sadd.s32 %s46, 1
      %p50 = scmp.eq.s32.totalorder %s17, 1
      %p51 = scmp.ne.s32.totalorder %s46, %s48
      %p52 = scmp.eq.s32.totalorder %s17, 0
      %p53 = por %p51, %p52
      %p54 = scmp.ne.s32.totalorder %s46, %s48
      %p55 = scmp.eq.s32.totalorder %s22, 1
      %p56 = por %p54, %p55
      %p57 = scmp.ne.s32.totalorder %s48, %s49
      %p58 = scmp.eq.s32.totalorder %s22, 0
      %p59 = por %p57, %p58
      %p60 = scmp.ne.s32.totalorder %s48, %s49
      %p61 = scmp.eq.s32.totalorder %s23, 1
      %p62 = por %p60, %p61
      %p64 = scmp.ne.s32.totalorder %s49, %s63
      %p65 = scmp.eq.s32.totalorder %s23, 0
      %p66 = por %p64, %p65
      %s67 = ssub.s32 %s17, %s24
      %p68 = scmp.eq.s32.totalorder %s67, 0
      %s70 = sadd.s32 %s69, 1
      %s71 = scalar_select %p68, %s69, %s70
      %p74 = pneg %p68
      %p75 = scmp.eq.s32.totalorder %s17, 1
      %p76 = por %p74, %p75
      %p77 = scmp.ne.s32.totalorder %s69, %s72
      %p78 = scmp.eq.s32.totalorder %s17, 0
      %p79 = por %p77, %p78
      %p80 = scmp.ne.s32.totalorder %s69, %s72
      %p81 = scmp.eq.s32.totalorder %s22, 1
      %p82 = por %p80, %p81
      %p83 = scmp.ne.s32.totalorder %s72, %s73
      %p84 = scmp.eq.s32.totalorder %s22, 0
      %p85 = por %p83, %p84
      %p86 = scmp.ne.s32.totalorder %s72, %s73
      %p87 = scmp.eq.s32.totalorder %s23, 1
      %p88 = por %p86, %p87
      %p90 = scmp.ne.s32.totalorder %s73, %s89
      %p91 = scmp.eq.s32.totalorder %s23, 0
      %p92 = por %p90, %p91
      %s93 = ssub.s32 %s17, %s24
      %p94 = scmp.eq.s32.totalorder %s93, 0
      %s96 = sadd.s32 %s95, 1
      %s97 = scalar_select %p94, %s95, %s96
      %p100 = pneg %p94
      %p101 = scmp.eq.s32.totalorder %s17, 1
      %p102 = por %p100, %p101
      %p103 = scmp.ne.s32.totalorder %s95, %s98
      %p104 = scmp.eq.s32.totalorder %s17, 0
      %p105 = por %p103, %p104
      %p106 = scmp.ne.s32.totalorder %s95, %s98
      %p107 = scmp.eq.s32.totalorder %s22, 1
      %p108 = por %p106, %p107
      %p109 = scmp.ne.s32.totalorder %s98, %s99
      %p110 = scmp.eq.s32.totalorder %s22, 0
      %p111 = por %p109, %p110
      %p112 = scmp.ne.s32.totalorder %s98, %s99
      %p113 = scmp.eq.s32.totalorder %s23, 1
      %p114 = por %p112, %p113
      %p116 = scmp.ne.s32.totalorder %s99, %s115
      %p117 = scmp.eq.s32.totalorder %s23, 0
      %p118 = por %p116, %p117
      %p119 = scmp.le.s32.totalorder 1, %s17
      %p120 = scmp.lt.s32.totalorder %s17, 3
      %p121 = pnand %p119, %p120
      %p122 = pneg %p121
      // Predicated region
      $region9: #{tpu_custom_call.1} parent=5 // pred_check
        _
      $region10: #{tpu_custom_call.1} parent=5 // pred_check_branch
        %124 = sbr.rel (%p121) target = $region12
      $region11: #{tpu_custom_call.1} parent=5 // pred_region
        %s125 = ssub.s32 %s17, 1
        // Predicated region
        $region13: #{tpu_custom_call.1} parent=11 // pred_check
          %p126 = pneg %p38
        $region14: #{tpu_custom_call.1} parent=11 // pred_check_branch
          %128 = sbr.rel (%p126) target = $region16
        $region15: #{tpu_custom_call.1} parent=11 // pred_region
          %s130 = ssub.s32 16, 16
          %131 = vsyncadd [#allocation6], %s130
          %134 = dma.hbm_to_smem %s0, 16, [#allocation3], [#allocation6]
        $region16: #{tpu_custom_call.1} parent=11 // pred_fallthru
          _
        // Predicated region
        $region17: #{tpu_custom_call.1} parent=11 // pred_check
          %p135 = pneg %p59
        $region18: #{tpu_custom_call.1} parent=11 // pred_check_branch
          %137 = sbr.rel (%p135) target = $region20
        $region19: #{tpu_custom_call.1} parent=11 // pred_region
          %s139 = ssub.s32 96, 96
          %140 = vsyncadd [#allocation4], %s139
          %s141 = sshll.u32 [#allocation7], 4
          %s142 = int_to_ptr.vmem [resolvable:$true] %s141
          %147 = dma.hbm_to_vmem [thread:$0]  %s1, 96, %s142, [#allocation4], 32, 32, 2
        $region20: #{tpu_custom_call.1} parent=11 // pred_fallthru
          _
      $region12: #{tpu_custom_call.1} parent=5 // pred_fallthru
        _
      %p148 = scmp.lt.s32.totalorder %s17, 2
      // Predicated region
      $region21: #{tpu_custom_call.1} parent=5 // pred_check
        %p149 = pneg %p148
      $region22: #{tpu_custom_call.1} parent=5 // pred_check_branch
        %151 = sbr.rel (%p149) target = $region24
      $region23: #{tpu_custom_call.1} parent=5 // pred_region
        // Predicated region
        $region25: #{tpu_custom_call.1} parent=23 // pred_check
          %p152 = pneg %p79
        $region26: #{tpu_custom_call.1} parent=23 // pred_check_branch
          %154 = sbr.rel (%p152) target = $region28
        $region27: #{tpu_custom_call.1} parent=23 // pred_region
          %s155 = sand.u32 %s69, 1
          %s156 = scalar_lea.sflag [#allocation9], %s155
          %s157 = sand.u32 %s69, 1
          %s158 = smul.addr %s157, 8
          %s159 = scalar_lea.vmem [#allocation8], %s158
          %s161 = ssub.s32 128, 128
          %162 = vsyncadd %s156, %s161
          %s163 = smul.addr %s17, 2
          %s164 = smul.addr %s163, 64
          %s165 = scalar_lea.hbm %s2, %s164
          %s167 = sshll.u32 %s159, 4
          %s168 = int_to_ptr.vmem [resolvable:$true] %s167
          %170 = dma.hbm_to_vmem [thread:$0]  %s165, 128, %s168, %s156
        $region28: #{tpu_custom_call.1} parent=23 // pred_fallthru
          _
      $region24: #{tpu_custom_call.1} parent=5 // pred_fallthru
        _
      %p171 = scmp.le.s32.totalorder 1, %s17
      %p172 = scmp.lt.s32.totalorder %s17, 3
      %p173 = pnand %p171, %p172
      %p174 = pneg %p173
      // Predicated region
      $region29: #{tpu_custom_call.1} parent=5 // pred_check
        _
      $region30: #{tpu_custom_call.1} parent=5 // pred_check_branch
        %176 = sbr.rel (%p173) target = $region32
      $region31: #{tpu_custom_call.1} parent=5 // pred_region
        %s177 = ssub.s32 %s17, 1
        // Predicated region
        $region33: #{tpu_custom_call.1} parent=31 // pred_check
          %p178 = pneg %p38
        $region34: #{tpu_custom_call.1} parent=31 // pred_check_branch
          %180 = sbr.rel (%p178) target = $region36
        $region35: #{tpu_custom_call.1} parent=31 // pred_region
          %181 = dma.done [#allocation6], 16
        $region36: #{tpu_custom_call.1} parent=31 // pred_fallthru
          _
        // Predicated region
        $region37: #{tpu_custom_call.1} parent=31 // pred_check
          %p182 = pneg %p59
        $region38: #{tpu_custom_call.1} parent=31 // pred_check_branch
          %184 = sbr.rel (%p182) target = $region40
        $region39: #{tpu_custom_call.1} parent=31 // pred_region
          %185 = dma.done [#allocation4], 96
        $region40: #{tpu_custom_call.1} parent=31 // pred_fallthru
          _
        %s186 = sand.u32 %s72, 1
        %s187 = scalar_lea.sflag [#allocation9], %s186
        %s188 = sand.u32 %s72, 1
        %s189 = smul.addr %s188, 8
        %s190 = scalar_lea.vmem [#allocation8], %s189
        // Predicated region
        $region41: #{tpu_custom_call.1} parent=31 // pred_check
          %p191 = pneg %p85
        $region42: #{tpu_custom_call.1} parent=31 // pred_check_branch
          %193 = sbr.rel (%p191) target = $region44
        $region43: #{tpu_custom_call.1} parent=31 // pred_region
          %194 = dma.done %s187, 128
        $region44: #{tpu_custom_call.1} parent=31 // pred_fallthru
          _
        %195 = sfence
        %p196 = pneg %p38
        %p197 = pneg %p35
        %p198 = pneg %p59
        %p199 = pneg %p56
        %s200 = sand.u32 %s72, 1
        %s201 = scalar_lea.sflag [#allocation9], %s200
        %s202 = sand.u32 %s72, 1
        %s203 = smul.addr %s202, 8
        %s204 = scalar_lea.vmem [#allocation8], %s203
        %p205 = pneg %p85
        %p206 = pneg %p82
        %p207 = pneg %p111
        %p208 = pneg %p108
        %s209 = sand.u32 %s98, 1
        %s210 = scalar_lea.sflag [#allocation5], %s209
        %s211 = sand.u32 %s98, 1
        %s212 = smul.addr %s211, 8
        %s213 = scalar_lea.vmem [#allocation10], %s212
        %v214 = vlaneseq
        %vm215 = vcmp.ge.s32.totalorder %v214, 0
        %vm216 = vcmp.lt.s32.totalorder %v214, 128
        %vm217 = vmand %vm215, %vm216
        %218 = vst.msk [vmem:[#allocation2] sm:$0x1] %vm217, 0.0
        %219 = vst.msk [vmem:[#allocation2 + $0x4] sm:$0x1] %vm217, 0.0
        %220 = vst.msk [vmem:[#allocation2 + $0x3] sm:$0x1] %vm217, 0.0
        %221 = vst.msk [vmem:[#allocation2 + $0x7] sm:$0x1] %vm217, 0.0
        %v222 = vld [vmem:[%s190] sm:$0xff]
        %v224 = vcombine.high %v222, %v222
        %vm226 = vcmask 1043456
        %v227 = vsel %vm226, %v222, -inf
        %v228 = vrot.slane %v227, 4
        %v229 = vmax.f32 %v227, %v228
        %v230 = vrot.slane %v229, 2
        %v231 = vmax.f32 %v229, %v230
        %v232 = vrot.slane %v231, 1
        %v233 = vmax.f32 %v231, %v232
        %v234 = vsel %vm226, %v224, -inf
        %v235 = vrot.slane %v234, 4
        %v236 = vmax.f32 %v234, %v235
        %v237 = vrot.slane %v236, 2
        %v238 = vmax.f32 %v236, %v237
        %v239 = vrot.slane %v238, 1
        %v240 = vmax.f32 %v238, %v239
        %v243 = vcombine.low %v233, %v240
        %v245 = vunpack.c.l.s4 1966171168
        %v246 = vunpack.c.0.s8 %v245
        %v247 = vlaneseq
        %v248 = vshrl.u32 %v247, 7
        %v249 = vsub.s32 %v246, %v248
        %v250 = vrot.slane %v243, %v249
        %v252 = vunpack.c.l.s4 1966171168
        %v253 = vunpack.c.0.s8 %v252
        %v254 = vlaneseq
        %v255 = vshrl.u32 %v254, 7
        %v256 = vsub.s32 %v253, %v255
        %v257 = vrot.slane %v250, %v256
        %vm259 = vcmp.lt.s32.totalorder %v214, 256
        %vm260 = vmand %vm215, %vm259
        %261 = vst.msk [vmem:[#allocation2 + $0x1] sm:$0x3] %vm260, %v257
        %v262 = vsel %vm226, %v222, 0.0
        %v263 = vrot.slane %v262, 4
        %v264 = vadd.f32 %v262, %v263
        %v265 = vrot.slane %v264, 2
        %v266 = vadd.f32 %v264, %v265
        %v267 = vrot.slane %v266, 1
        %v268 = vadd.f32 %v266, %v267
        %v269 = vsel %vm226, %v224, 0.0
        %v270 = vrot.slane %v269, 4
        %v271 = vadd.f32 %v269, %v270
        %v272 = vrot.slane %v271, 2
        %v273 = vadd.f32 %v271, %v272
        %v274 = vrot.slane %v273, 1
        %v275 = vadd.f32 %v273, %v274
        %v278 = vcombine.low %v268, %v275
        %v280 = vunpack.c.l.s4 1966171168
        %v281 = vunpack.c.0.s8 %v280
        %v282 = vlaneseq
        %v283 = vshrl.u32 %v282, 7
        %v284 = vsub.s32 %v281, %v283
        %v285 = vrot.slane %v278, %v284
        %v287 = vunpack.c.l.s4 1966171168
        %v288 = vunpack.c.0.s8 %v287
        %v289 = vlaneseq
        %v290 = vshrl.u32 %v289, 7
        %v291 = vsub.s32 %v288, %v290
        %v292 = vrot.slane %v285, %v291
        %s294 = scalar_lea.vmem [#allocation2], 4
        %295 = vst.msk [vmem:[%s294 + $0x1] sm:$0x3] %vm260, %v292
        %s296 = sld [smem:[#allocation3]]
        %v297 = vld [vmem:[#allocation2] sm:$0x7]
        %v298 = vstv %s296
        %v299 = vmul.f32 %v298, %v297
        %v300 = vadd.f32 %v299, 0.0
        %s301 = sld [smem:[#allocation3 + $0x3]]
        %v302 = vstv %s301
        %v303 = vmul.f32 %v302, %v297
        %305 = vrot.lane.b32.xlu0 %v303, 112
        %v306 = vpop.permute.xlu0 %305
        %v307 = vrot.slane %v306, 1
        %vm308 = vcmask 916480
        %v309 = vsel %vm308, %v306, %v307
        %v311 = vadd.f32 %v300, %v309
        %s312 = sld [smem:[#allocation3 + $0x6]]
        %v313 = vld [vmem:[#allocation2 + $0x1] sm:$0x7]
        %v314 = vstv %s312
        %v315 = vmul.f32 %v314, %v313
        %317 = vrot.lane.b32.xlu0 %v315, 96
        %v318 = vpop.permute.xlu0 %317
        %v319 = vrot.slane %v318, 7
        %vm320 = vcmask 785408
        %v321 = vsel %vm320, %v319, %v318
        %v323 = vadd.f32 %v311, %v321
        %s324 = sld [smem:[#allocation3 + $0x9]]
        %v325 = vld [vmem:[%s294] sm:$0x7]
        %v326 = vstv %s324
        %v327 = vmul.f32 %v326, %v325
        %v328 = vadd.f32 %v323, %v327
        %s329 = sld [smem:[#allocation3 + $0xc]]
        %v330 = vstv %s329
        %v331 = vmul.f32 %v330, %v325
        %333 = vrot.lane.b32.xlu0 %v331, 112
        %v334 = vpop.permute.xlu0 %333
        %v335 = vrot.slane %v334, 1
        %v336 = vsel %vm308, %v334, %v335
        %v338 = vadd.f32 %v328, %v336
        %s339 = sld [smem:[#allocation3 + $0xf]]
        %v340 = vld [vmem:[%s294 + $0x1] sm:$0x7]
        %v341 = vstv %s339
        %v342 = vmul.f32 %v341, %v340
        %344 = vrot.lane.b32.xlu0 %v342, 96
        %v345 = vpop.permute.xlu0 %344
        %v346 = vrot.slane %v345, 7
        %v347 = vsel %vm320, %v346, %v345
        %v349 = vadd.f32 %v338, %v347
        %v350 = vld [vmem:[#allocation7] sm:$0x3]
        %352 = vrot.lane.b32.xlu0 %v350, 111
        %v353 = vpop.permute.xlu0 %352
        %v354 = vrot.slane %v353, 7
        %vm355 = vcmask 908288
        %v356 = vsel %vm355, %v354, %v353
        %v358 = vmul.f32 %v349, %v356
        %v359 = vadd.f32 %v358, 0.0
        %s360 = sld [smem:[#allocation3 + $0x1]]
        %v361 = vstv %s360
        %v362 = vmul.f32 %v361, %v297
        %v363 = vadd.f32 %v362, 0.0
        %s364 = sld [smem:[#allocation3 + $0x4]]
        %v365 = vld [vmem:[#allocation2 + $0x1] sm:$0x3]
        %v366 = vstv %s364
        %v367 = vmul.f32 %v366, %v365
        %369 = vrot.lane.b32.xlu0 %v367, 112
        %v370 = vpop.permute.xlu0 %369
        %v371 = vrot.slane %v370, 7
        %v372 = vsel %vm308, %v371, %v370
        %v374 = vadd.f32 %v363, %v372
        %s375 = sld [smem:[#allocation3 + $0x7]]
        %v376 = vstv %s375
        %v377 = vmul.f32 %v376, %v313
        %379 = vrot.lane.b32.xlu0 %v377, 96
        %v380 = vpop.permute.xlu0 %379
        %v381 = vrot.slane %v380, 7
        %v382 = vsel %vm320, %v381, %v380
        %v384 = vadd.f32 %v374, %v382
        %s385 = sld [smem:[#allocation3 + $0xa]]
        %v386 = vstv %s385
        %v387 = vmul.f32 %v386, %v325
        %v388 = vadd.f32 %v384, %v387
        %s389 = sld [smem:[#allocation3 + $0xd]]
        %v390 = vld [vmem:[%s294 + $0x1] sm:$0x3]
        %v391 = vstv %s389
        %v392 = vmul.f32 %v391, %v390
        %394 = vrot.lane.b32.xlu0 %v392, 112
        %v395 = vpop.permute.xlu0 %394
        %v396 = vrot.slane %v395, 7
        %v397 = vsel %vm308, %v396, %v395
        %v399 = vadd.f32 %v388, %v397
        %s400 = sld [smem:[#allocation3 + $0x10]]
        %v401 = vstv %s400
        %v402 = vmul.f32 %v401, %v340
        %404 = vrot.lane.b32.xlu0 %v402, 96
        %v405 = vpop.permute.xlu0 %404
        %v406 = vrot.slane %v405, 7
        %v407 = vsel %vm320, %v406, %v405
        %v409 = vadd.f32 %v399, %v407
        %411 = vrot.lane.b32.xlu0 %v409, 127
        %v412 = vpop.permute.xlu0 %411
        %v413 = vrot.slane %v412, 1
        %vm414 = vcmask 1039360
        %v415 = vsel %vm414, %v412, %v413
        %v417 = vadd.f32 %v359, %v415
        %s418 = sld [smem:[#allocation3 + $0x2]]
        %v419 = vstv %s418
        %v420 = vmul.f32 %v419, %v297
        %v421 = vadd.f32 %v420, 0.0
        %s422 = sld [smem:[#allocation3 + $0x5]]
        %v423 = vstv %s422
        %v424 = vmul.f32 %v423, %v313
        %426 = vrot.lane.b32.xlu0 %v424, 112
        %v427 = vpop.permute.xlu0 %426
        %v428 = vrot.slane %v427, 7
        %v429 = vsel %vm308, %v428, %v427
        %v431 = vadd.f32 %v421, %v429
        %s432 = sld [smem:[#allocation3 + $0x8]]
        %v433 = vstv %s432
        %v434 = vmul.f32 %v433, %v313
        %436 = vrot.lane.b32.xlu0 %v434, 96
        %v437 = vpop.permute.xlu0 %436
        %v438 = vrot.slane %v437, 7
        %v439 = vsel %vm320, %v438, %v437
        %v441 = vadd.f32 %v431, %v439
        %s442 = sld [smem:[#allocation3 + $0xb]]
        %v443 = vstv %s442
        %v444 = vmul.f32 %v443, %v325
        %v445 = vadd.f32 %v441, %v444
        %s446 = sld [smem:[#allocation3 + $0xe]]
        %v447 = vstv %s446
        %v448 = vmul.f32 %v447, %v340
        %450 = vrot.lane.b32.xlu0 %v448, 112
        %v451 = vpop.permute.xlu0 %450
        %v452 = vrot.slane %v451, 7
        %v453 = vsel %vm308, %v452, %v451
        %v455 = vadd.f32 %v445, %v453
        %s456 = sld [smem:[#allocation3 + $0x11]]
        %v457 = vstv %s456
        %v458 = vmul.f32 %v457, %v340
        %460 = vrot.lane.b32.xlu0 %v458, 96
        %v461 = vpop.permute.xlu0 %460
        %v462 = vrot.slane %v461, 7
        %v463 = vsel %vm320, %v462, %v461
        %v465 = vadd.f32 %v455, %v463
        %s466 = scalar_lea.vmem [#allocation7], 4
        %v467 = vld [vmem:[%s466] sm:$0x3]
        %469 = vrot.lane.b32.xlu0 %v467, 113
        %v470 = vpop.permute.xlu0 %469
        %v471 = vrot.slane %v470, 7
        %vm472 = vcmask 924672
        %v473 = vsel %vm472, %v471, %v470
        %v475 = vmul.f32 %v465, %v473
        %477 = vrot.lane.b32.xlu0 %v475, 126
        %v478 = vpop.permute.xlu0 %477
        %v479 = vrot.slane %v478, 1
        %vm480 = vcmask 1031168
        %v481 = vsel %vm480, %v478, %v479
        %v483 = vadd.f32 %v417, %v481
        %v484 = vxor.u32 %v483, 2147483648
        %v485 = vmul.f32 %v484, 1.442695
        %v486 = vpow.pop %v485
        %v487 = vadd.f32 %v486, 1.0
        %v488 = vrcp.pop %v487
        %v489 = vmul.f32 1.0, %v488
        %v490 = vld [vmem:[%s190] sm:$0xff]
        %v492 = vlaneseq
        %v493 = vshrl.u32 %v492, 7
        %v494 = vsub.s32 0, %v493
        %v495 = vrot.slane %v489, %v494
        %v496 = vlaneseq
        %v497 = vshrl.u32 %v496, 7
        %v498 = vsub.s32 1, %v497
        %v499 = vrot.slane %v489, %v498
        %v500 = vlaneseq
        %v501 = vshrl.u32 %v500, 7
        %v502 = vsub.s32 2, %v501
        %v503 = vrot.slane %v489, %v502
        %v504 = vcombine.low %v495, %v499
        %505 = vrot.lane.b32.xlu0 %v504, 17
        %v506 = vpop.permute.xlu0 %505
        %507 = vrot.lane.b32.xlu0 %v503, 17
        %v508 = vpop.permute.xlu0 %507
        %v509 = vrot.slane %v506, 4
        %v510 = vrot.slane %v508, 4
        %v511 = vsel %vm226, %v509, %v510
        %vm512 = vcmask 138240
        %v513 = vsel %vm512, %v506, %v511
        %v515 = vmul.f32 %v490, %v513
        %516 = vst [vmem:[%s213] sm:$0xff] %v515
        %s517 = sand.u32 %s98, 1
        %s518 = scalar_lea.sflag [#allocation5], %s517
        %s519 = sand.u32 %s98, 1
        %s520 = smul.addr %s519, 8
        %s521 = scalar_lea.vmem [#allocation10], %s520
        // Predicated region
        $region45: #{tpu_custom_call.1} parent=31 // pred_check
          %p522 = pneg %p108
        $region46: #{tpu_custom_call.1} parent=31 // pred_check_branch
          %524 = sbr.rel (%p522) target = $region48
        $region47: #{tpu_custom_call.1} parent=31 // pred_region
          %s526 = ssub.s32 128, 128
          %527 = vsyncadd %s518, %s526
          %s528 = smul.addr %s22, 2
          %s529 = smul.addr %s528, 64
          %s530 = scalar_lea.hbm %s3, %s529
          %s532 = sshll.u32 %s521, 4
          %s533 = int_to_ptr.vmem [resolvable:$true] %s532
          %535 = dma.vmem_to_hbm [thread:$0]  %s533, 128, %s530, %s518
        $region48: #{tpu_custom_call.1} parent=31 // pred_fallthru
          _
      $region32: #{tpu_custom_call.1} parent=5 // pred_fallthru
        _
      %p536 = scmp.le.s32.totalorder 2, %s17
      // Predicated region
      $region49: #{tpu_custom_call.1} parent=5 // pred_check
        %p537 = pneg %p536
      $region50: #{tpu_custom_call.1} parent=5 // pred_check_branch
        %539 = sbr.rel (%p537) target = $region52
      $region51: #{tpu_custom_call.1} parent=5 // pred_region
        %s540 = ssub.s32 %s17, 2
        // Predicated region
        $region53: #{tpu_custom_call.1} parent=51 // pred_check
          %p541 = pneg %p114
        $region54: #{tpu_custom_call.1} parent=51 // pred_check_branch
          %543 = sbr.rel (%p541) target = $region56
        $region55: #{tpu_custom_call.1} parent=51 // pred_region
          %s544 = sand.u32 %s99, 1
          %s545 = scalar_lea.sflag [#allocation5], %s544
          %s546 = sand.u32 %s99, 1
          %s547 = smul.addr %s546, 8
          %s548 = scalar_lea.vmem [#allocation10], %s547
          %549 = dma.done %s545, 128
        $region56: #{tpu_custom_call.1} parent=51 // pred_fallthru
          _
      $region52: #{tpu_custom_call.1} parent=5 // pred_fallthru
        _
    $region6: #{tpu_custom_call.1} parent=1 // loop_footer
      %s21 = sadd.s32 1, %s17
    $region7: #{tpu_custom_call.1} parent=1 // loop_footer_branch
      %16 = sbr.rel target = $region3
    $region8: #{tpu_custom_call.1} parent=1 // loop_exit
      _
    %550 = vsyncpa [#allocation4], 1
    %s551 = scalar_lea.sflag [#allocation4], 1
    %552 = vsyncpa %s551, 1
    %553 = vsyncpa [#allocation9], 1
    %s554 = scalar_lea.sflag [#allocation9], 1
    %555 = vsyncpa %s554, 1
    %556 = vsyncpa [#allocation5], 1
    %s557 = scalar_lea.sflag [#allocation5], 1
    %558 = vsyncpa %s557, 1
    %559 = vsyncpa [#allocation6], 1
    %s560 = scalar_lea.sflag [#allocation6], 1
    %561 = vsyncpa %s560, 1

</llo_original>
